<compile_context>
chip_gen: v6e
topology: v6e:2x2x1
jax: 0.10.0
libtpu: 0.0.40
codegen_flags: <defaults>
</compile_context>

<pallas_src>
import functools

import jax
import jax.numpy as jnp
from jax.experimental import pallas as pl
from jax.experimental.pallas import tpu as pltpu

EPS = 1e-5  # nn.BatchNorm2d default eps


# ---------------------------------------------------------------------------
# Pass 1: global batch statistics via the Gram-matrix trick.
#   outputs (accumulated across the whole grid, written back to HBM once):
#     sum_ref  (Cin, 1)    = sum_p x[:, p]
#     gram_ref (Cin, Cin)  = sum_p x[:, p] x[:, p]^T
# ---------------------------------------------------------------------------
def _stats_kernel(x_ref, sum_ref, gram_ref, *, hw, tile):
    n = pl.program_id(0)
    t = pl.program_id(1)

    @pl.when(jnp.logical_and(n == 0, t == 0))
    def _init():
        sum_ref[...] = jnp.zeros(sum_ref.shape, jnp.float32)
        gram_ref[...] = jnp.zeros(gram_ref.shape, jnp.float32)

    x = x_ref[0].astype(jnp.float32)                       # (Cin, TILE)

    if hw % tile != 0:
        # Ragged last tile: mask out-of-range pixel lanes before reducing.
        lane = jax.lax.broadcasted_iota(jnp.int32, x.shape, dimension=1)
        x = jnp.where(lane + t * tile < hw, x, 0.0)

    sum_ref[...] += jnp.sum(x, axis=1, keepdims=True)      # lane reduce (XLU)
    # Contract the lane (pixel) dim of both operands -> (Cin, Cin) on the MXU.
    gram_ref[...] += jax.lax.dot_general(
        x, x, dimension_numbers=(((1,), (1,)), ((), ())),
        preferred_element_type=jnp.float32)


# ---------------------------------------------------------------------------
# Pass 2: fused ConvTranspose taps + folded BatchNorm + ReLU.
#   y = Wstack @ x                      (KK*Cout, TILE), f32 accumulation
#   o = max(y * scale + shift, 0)       cast to the (bf16) output dtype
# ---------------------------------------------------------------------------
def _apply_kernel(x_ref, w_ref, scale_ref, shift_ref, o_ref):
    x = x_ref[0]                                           # (Cin, TILE)
    y = jnp.dot(w_ref[...], x, preferred_element_type=jnp.float32)
    y = y * scale_ref[...] + shift_ref[...]                # folded BN: one FMA
    o_ref[0] = jnp.maximum(y, 0.0).astype(o_ref.dtype)     # ReLU + narrow store


def _pick_tile(hw: int, cap: int) -> int:
    """Whole image row-block if it fits (block == full dim is always legal),
    otherwise a lane-dense multiple-of-128 cap; ragged tails are masked."""
    if hw <= cap:
        return hw
    return cap  # caps are multiples of 128


def _vmem_limit(block_bytes: int) -> int:
    # double-buffered blocks + headroom, clamped to a range that is safe on
    # v5e/v6e (128 MiB physical) and v7x (64 MiB physical).
    need = 2 * block_bytes + (4 << 20)
    return int(min(max(need, 32 << 20), 48 << 20))


def conv_transpose_block(x, w, gamma, beta, *, out_dtype=jnp.bfloat16,
                         stats_tile=None, apply_tile=None, layout="nchw"):
    """Forward of ConvTranspose(in_ch, out_ch, scale_factor, ReLU, norm='batch')."""
    N, Cin, H, W = x.shape
    Cin_w, Cout, KH, KW = w.shape
    assert Cin_w == Cin and KH == KW, "weight must be (Cin, Cout, s, s)"
    s = KH
    KK = KH * KW
    HW = H * W

    # ---- layout plumbing (all free reshapes, no HBM relayout of x) ----------
    x3 = x.reshape(N, Cin, HW)                               # native NCHW view
    # (Cin, Cout, KH, KW) -> (KK*Cout, Cin), rows ordered (kh, kw, co)
    wstack = jnp.transpose(w, (2, 3, 1, 0)).reshape(KK * Cout, Cin)

    if stats_tile is None:
        stats_tile = _pick_tile(HW, cap=32768)   # input-only pass: big tiles
    if apply_tile is None:
        apply_tile = _pick_tile(HW, cap=8192)

    itemsize_x = jnp.dtype(x3.dtype).itemsize
    itemsize_o = jnp.dtype(out_dtype).itemsize

    # ---------------- pass 1: sum_x and Gram over the whole batch ------------
    nt_s = pl.cdiv(HW, stats_tile)
    sum_x, gram = pl.pallas_call(
        functools.partial(_stats_kernel, hw=HW, tile=stats_tile),
        out_shape=(jax.ShapeDtypeStruct((Cin, 1), jnp.float32),
                   jax.ShapeDtypeStruct((Cin, Cin), jnp.float32)),
        grid_spec=pltpu.PrefetchScalarGridSpec(
            num_scalar_prefetch=0,
            grid=(N, nt_s),
            in_specs=[pl.BlockSpec((1, Cin, stats_tile), lambda n, t: (n, 0, t))],
            # accumulator outputs: block index pinned -> single HBM writeback
            out_specs=[pl.BlockSpec((Cin, 1), lambda n, t: (0, 0)),
                       pl.BlockSpec((Cin, Cin), lambda n, t: (0, 0))]),
        compiler_params=pltpu.CompilerParams(
            dimension_semantics=("arbitrary", "arbitrary"),
            vmem_limit_bytes=_vmem_limit(Cin * stats_tile * itemsize_x)),
        cost_estimate=pl.CostEstimate(
            flops=2 * Cin * Cin * N * HW,
            transcendentals=0,
            bytes_accessed=N * Cin * HW * itemsize_x),
    )(x3)

    # ---- fold BN statistics into per-row scale/shift (tiny, plain JAX) ------
    wf = wstack.astype(jnp.float32)
    count = float(N * HW * KK)                        # N * (H*s) * (W*s) per channel
    row_sum = wf @ sum_x[:, 0]                        # (KK*Cout,)  sum_p y_row
    row_ssq = jnp.sum((wf @ gram) * wf, axis=1)       # (KK*Cout,)  sum_p y_row^2
    ch_sum = row_sum.reshape(KK, Cout).sum(axis=0)
    ch_ssq = row_ssq.reshape(KK, Cout).sum(axis=0)
    mean = ch_sum / count
    # One-pass (E[y^2] - mean^2) variance, f32; clamp tiny negatives.
    # TODO(synk): use centered per-tile partials if accuracy matters at large NHW.
    var = jnp.maximum(ch_ssq / count - mean * mean, 0.0)
    scale_c = gamma.astype(jnp.float32) * jax.lax.rsqrt(var + EPS)
    shift_c = beta.astype(jnp.float32) - mean * scale_c
    scale = jnp.tile(scale_c, (KK,)).reshape(KK * Cout, 1)   # row (kk*Cout + co)
    shift = jnp.tile(shift_c, (KK,)).reshape(KK * Cout, 1)

    # ---------------- pass 2: conv taps + folded BN + ReLU --------------------
    nt_a = pl.cdiv(HW, apply_tile)
    apply_block_bytes = (Cin * apply_tile * itemsize_x
                         + KK * Cout * apply_tile * itemsize_o
                         + KK * Cout * (Cin + 2) * 4)
    out3 = pl.pallas_call(
        _apply_kernel,
        out_shape=jax.ShapeDtypeStruct((N, KK * Cout, HW), out_dtype),
        grid_spec=pltpu.PrefetchScalarGridSpec(
            num_scalar_prefetch=0,
            grid=(N, nt_a),
            in_specs=[
                pl.BlockSpec((1, Cin, apply_tile), lambda n, t: (n, 0, t)),
                pl.BlockSpec((KK * Cout, Cin), lambda n, t: (0, 0)),
                pl.BlockSpec((KK * Cout, 1), lambda n, t: (0, 0)),
                pl.BlockSpec((KK * Cout, 1), lambda n, t: (0, 0)),
            ],
            out_specs=pl.BlockSpec((1, KK * Cout, apply_tile),
                                   lambda n, t: (n, 0, t))),
        compiler_params=pltpu.CompilerParams(
            # no cross-tile state in this pass -> megacore-shards on v7x
            dimension_semantics=("parallel", "parallel"),
            vmem_limit_bytes=_vmem_limit(apply_block_bytes)),
        cost_estimate=pl.CostEstimate(
            flops=2 * KK * Cout * Cin * N * HW,
            transcendentals=0,
            bytes_accessed=(N * Cin * HW * itemsize_x
                            + KK * Cout * Cin * itemsize_x
                            + N * KK * Cout * HW * itemsize_o)),
    )(x3, wstack.astype(x3.dtype), scale, shift)

    if layout == "native":
        # (N, KK*Cout, H*W): rows ordered (kh, kw, co), lanes (h, w)
        return out3

    # TODO(synk): this XLA transpose re-reads/re-writes the full (bf16) output in
    # HBM; consumers that can take layout="native" should skip it.
    out6 = out3.reshape(N, KH, KW, Cout, H, W)
    out = jnp.transpose(out6, (0, 3, 4, 1, 5, 2)).reshape(N, Cout, H * s, W * s)
    return out


def reference(x, w, gamma, beta):
    """Pure-JAX reference: ConvTranspose2d(k=s, stride=s, no bias) + BN + ReLU."""
    N, Cin, H, W = x.shape
    _, Cout, KH, KW = w.shape
    y = jnp.einsum('nihw,iokl->nohkwl', x, w).reshape(N, Cout, H * KH, W * KW)
    mean = y.mean(axis=(0, 2, 3), keepdims=True)
    var = ((y - mean) ** 2).mean(axis=(0, 2, 3), keepdims=True)
    y = (y - mean) * jax.lax.rsqrt(var + EPS)
    y = y * gamma.reshape(1, -1, 1, 1) + beta.reshape(1, -1, 1, 1)
    return jnp.maximum(y, 0.0)


if __name__ == "__main__":
    # Module config: ConvTranspose(in_channels=4, out_channels=8, scale_factor=2,
    #                              f_act=nn.ReLU(), norm_layer='batch')
    N, Cin, Cout, H, W, S = 2, 4, 8, 16, 16, 2

    key = jax.random.PRNGKey(0)
    kx, kw, kg, kb = jax.random.split(key, 4)
    x = jax.random.normal(kx, (N, Cin, H, W), jnp.float32)
    # nn.ConvTranspose2d weight layout: (in_channels, out_channels, KH, KW)
    w = jax.random.normal(kw, (Cin, Cout, S, S), jnp.float32) * 0.2
    gamma = 1.0 + 0.1 * jax.random.normal(kg, (Cout,), jnp.float32)  # BN weight
    beta = 0.1 * jax.random.normal(kb, (Cout,), jnp.float32)         # BN bias

    ref = reference(x, w, gamma, beta)

    fwd = jax.jit(conv_transpose_block,
                  static_argnames=("out_dtype", "stats_tile", "apply_tile", "layout"))

    # f32 output + small explicit tiles: exercises multi-tile accumulation and
    # checks exactness against the reference.
    out_f32 = fwd(x, w, gamma, beta, out_dtype=jnp.float32,
                  stats_tile=128, apply_tile=128)
    jax.block_until_ready(out_f32)
    assert out_f32.shape == (N, Cout, H * S, W * S)
    assert jnp.allclose(out_f32, ref, atol=1e-4, rtol=1e-4), \
        f"f32 max abs diff = {jnp.max(jnp.abs(out_f32 - ref))}"

    # Default (bf16 output, auto tiles): halves the dominant HBM write traffic.
    out_bf16 = fwd(x, w, gamma, beta)
    jax.block_until_ready(out_bf16)
    assert out_bf16.dtype == jnp.bfloat16
    err = jnp.max(jnp.abs(out_bf16.astype(jnp.float32) - ref))
    assert err < 5e-2, f"bf16 max abs diff = {err}"

    print("KERNEL_OK")
</pallas_src>

<mosaic_0001>
module attributes {stable_mosaic.version = 11 : i64} {
  func.func @_stats_kernel(%arg0: i32, %arg1: i32, %arg2: memref<1x4x128xf32, #tpu.memory_space<vmem>>, %arg3: memref<4x1xf32, #tpu.memory_space<vmem>>, %arg4: memref<4x4xf32, #tpu.memory_space<vmem>>) attributes {dimension_semantics = [#tpu.dimension_semantics<arbitrary>, #tpu.dimension_semantics<arbitrary>], iteration_bounds = array<i64: 2, 2>, scalar_prefetch = 0 : i64, scratch_operands = 0 : i64, tpu.core_type = #tpu.core_type<tc>, window_params = [{transform_indices = @transform_0, window_bounds = array<i64: 1, 4, 128>}, {pipeline_mode = #tpu.pipeline_mode<synchronous>, transform_indices = @transform_1, window_bounds = array<i64: 4, 1>}, {pipeline_mode = #tpu.pipeline_mode<synchronous>, transform_indices = @transform_2, window_bounds = array<i64: 4, 4>}]} {
    %c0_i32 = arith.constant 0 : i32
    %0 = arith.cmpi eq, %arg0, %c0_i32 : i32
    %c0_i32_0 = arith.constant 0 : i32
    %1 = arith.cmpi eq, %arg1, %c0_i32_0 : i32
    %2 = arith.andi %0, %1 : i1
    %3 = arith.extui %2 : i1 to i32
    %c0_i32_1 = arith.constant 0 : i32
    %4 = arith.cmpi ne, %3, %c0_i32_1 : i32
    scf.if %4 {
      %cst_13 = arith.constant 0.000000e+00 : f32
      %16 = vector.broadcast %cst_13 : f32 to vector<4x1xf32>
      %c0_14 = arith.constant 0 : index
      %c0_15 = arith.constant 0 : index
      %17 = vector.load %arg3[%c0_14, %c0_15] : memref<4x1xf32, #tpu.memory_space<vmem>>, vector<4x1xf32>
      tpu.vector_store %arg3[%c0_14, %c0_15], %16 {strides = array<i32>} : memref<4x1xf32, #tpu.memory_space<vmem>>, vector<4x1xf32>,
      %cst_16 = arith.constant 0.000000e+00 : f32
      %18 = vector.broadcast %cst_16 : f32 to vector<4x4xf32>
      %c0_17 = arith.constant 0 : index
      %c0_18 = arith.constant 0 : index
      %19 = vector.load %arg4[%c0_17, %c0_18] : memref<4x4xf32, #tpu.memory_space<vmem>>, vector<4x4xf32>
      tpu.vector_store %arg4[%c0_17, %c0_18], %18 {strides = array<i32>} : memref<4x4xf32, #tpu.memory_space<vmem>>, vector<4x4xf32>,
    } else {
    }
    %c0 = arith.constant 0 : index
    %c0_2 = arith.constant 0 : index
    %c0_3 = arith.constant 0 : index
    %5 = vector.load %arg2[%c0, %c0_2, %c0_3] : memref<1x4x128xf32, #tpu.memory_space<vmem>>, vector<1x4x128xf32>
    %6 = vector.shape_cast %5 : vector<1x4x128xf32> to vector<4x128xf32>
    %c0_4 = arith.constant 0 : index
    %c0_5 = arith.constant 0 : index
    %7 = vector.load %arg3[%c0_4, %c0_5] : memref<4x1xf32, #tpu.memory_space<vmem>>, vector<4x1xf32>
    %cst = arith.constant dense<0.000000e+00> : vector<4xf32>
    %8 = vector.multi_reduction <add>, %6, %cst [1] : vector<4x128xf32> to vector<4xf32>
    %9 = vector.shape_cast %8 : vector<4xf32> to vector<4x1xf32>
    %10 = arith.addf %7, %9 : vector<4x1xf32>
    %c0_6 = arith.constant 0 : index
    %c0_7 = arith.constant 0 : index
    %11 = vector.load %arg3[%c0_6, %c0_7] : memref<4x1xf32, #tpu.memory_space<vmem>>, vector<4x1xf32>
    tpu.vector_store %arg3[%c0_6, %c0_7], %10 {strides = array<i32>} : memref<4x1xf32, #tpu.memory_space<vmem>>, vector<4x1xf32>,
    %c0_8 = arith.constant 0 : index
    %c0_9 = arith.constant 0 : index
    %12 = vector.load %arg4[%c0_8, %c0_9] : memref<4x4xf32, #tpu.memory_space<vmem>>, vector<4x4xf32>
    %cst_10 = arith.constant dense<0.000000e+00> : vector<4x4xf32>
    %13 = tpu.matmul %6, %6, %cst_10 {dimension_numbers = #tpu.dot_dimension_numbers<[1], [1], [0], [0], [0, 0, 1, 0], [], []>} : vector<4x128xf32>, vector<4x128xf32>, vector<4x4xf32> -> vector<4x4xf32>
    %14 = arith.addf %12, %13 : vector<4x4xf32>
    %c0_11 = arith.constant 0 : index
    %c0_12 = arith.constant 0 : index
    %15 = vector.load %arg4[%c0_11, %c0_12] : memref<4x4xf32, #tpu.memory_space<vmem>>, vector<4x4xf32>
    tpu.vector_store %arg4[%c0_11, %c0_12], %14 {strides = array<i32>} : memref<4x4xf32, #tpu.memory_space<vmem>>, vector<4x4xf32>,
    return
  }
  func.func @transform_0(%arg0: i32, %arg1: i32) -> (i32, i32, i32) {
    %c0_i32 = arith.constant 0 : i32
    %c0_i32_0 = arith.constant 0 : i32
    return %arg0, %c0_i32, %arg1 : i32, i32, i32
  }
  func.func @transform_1(%arg0: i32, %arg1: i32) -> (i32, i32) {
    %c0_i32 = arith.constant 0 : i32
    %c0_i32_0 = arith.constant 0 : i32
    %c0_i32_1 = arith.constant 0 : i32
    return %c0_i32, %c0_i32_0 : i32, i32
  }
  func.func @transform_2(%arg0: i32, %arg1: i32) -> (i32, i32) {
    %c0_i32 = arith.constant 0 : i32
    %c0_i32_0 = arith.constant 0 : i32
    %c0_i32_1 = arith.constant 0 : i32
    return %c0_i32, %c0_i32_0 : i32, i32
  }
}

module attributes {stable_mosaic.version = 11 : i64} {
  func.func @_apply_kernel(%arg0: i32, %arg1: i32, %arg2: memref<1x4x128xf32, #tpu.memory_space<vmem>>, %arg3: memref<32x4xf32, #tpu.memory_space<vmem>>, %arg4: memref<32x1xf32, #tpu.memory_space<vmem>>, %arg5: memref<32x1xf32, #tpu.memory_space<vmem>>, %arg6: memref<1x32x128xf32, #tpu.memory_space<vmem>>) attributes {dimension_semantics = [#tpu.dimension_semantics<parallel>, #tpu.dimension_semantics<parallel>], iteration_bounds = array<i64: 2, 2>, scalar_prefetch = 0 : i64, scratch_operands = 0 : i64, tpu.core_type = #tpu.core_type<tc>, window_params = [{transform_indices = @transform_0, window_bounds = array<i64: 1, 4, 128>}, {pipeline_mode = #tpu.pipeline_mode<synchronous>, transform_indices = @transform_1, window_bounds = array<i64: 32, 4>}, {pipeline_mode = #tpu.pipeline_mode<synchronous>, transform_indices = @transform_2, window_bounds = array<i64: 32, 1>}, {pipeline_mode = #tpu.pipeline_mode<synchronous>, transform_indices = @transform_3, window_bounds = array<i64: 32, 1>}, {transform_indices = @transform_4, window_bounds = array<i64: 1, 32, 128>}]} {
    %c0 = arith.constant 0 : index
    %c0_0 = arith.constant 0 : index
    %c0_1 = arith.constant 0 : index
    %0 = vector.load %arg2[%c0, %c0_0, %c0_1] : memref<1x4x128xf32, #tpu.memory_space<vmem>>, vector<1x4x128xf32>
    %1 = vector.shape_cast %0 : vector<1x4x128xf32> to vector<4x128xf32>
    %c0_2 = arith.constant 0 : index
    %c0_3 = arith.constant 0 : index
    %2 = vector.load %arg3[%c0_2, %c0_3] : memref<32x4xf32, #tpu.memory_space<vmem>>, vector<32x4xf32>
    %cst = arith.constant dense<0.000000e+00> : vector<32x128xf32>
    %3 = tpu.matmul %2, %1, %cst {dimension_numbers = #tpu.dot_dimension_numbers<[1], [0], [0], [1], [0, 0, 1, 1], [], []>} : vector<32x4xf32>, vector<4x128xf32>, vector<32x128xf32> -> vector<32x128xf32>
    %c0_4 = arith.constant 0 : index
    %c0_5 = arith.constant 0 : index
    %4 = vector.load %arg4[%c0_4, %c0_5] : memref<32x1xf32, #tpu.memory_space<vmem>>, vector<32x1xf32>
    %5 = vector.broadcast %4 : vector<32x1xf32> to vector<32x128xf32>
    %6 = arith.mulf %3, %5 : vector<32x128xf32>
    %c0_6 = arith.constant 0 : index
    %c0_7 = arith.constant 0 : index
    %7 = vector.load %arg5[%c0_6, %c0_7] : memref<32x1xf32, #tpu.memory_space<vmem>>, vector<32x1xf32>
    %8 = vector.broadcast %7 : vector<32x1xf32> to vector<32x128xf32>
    %9 = arith.addf %6, %8 : vector<32x128xf32>
    %cst_8 = arith.constant 0.000000e+00 : f32
    %10 = vector.broadcast %cst_8 : f32 to vector<32x128xf32>
    %11 = arith.maximumf %9, %10 : vector<32x128xf32>
    %c0_9 = arith.constant 0 : index
    %c0_10 = arith.constant 0 : index
    %c0_11 = arith.constant 0 : index
    %12 = vector.load %arg6[%c0_9, %c0_10, %c0_11] : memref<1x32x128xf32, #tpu.memory_space<vmem>>, vector<1x32x128xf32>
    %13 = vector.shape_cast %12 : vector<1x32x128xf32> to vector<32x128xf32>
    %14 = vector.shape_cast %11 : vector<32x128xf32> to vector<1x32x128xf32>
    tpu.vector_store %arg6[%c0_9, %c0_10, %c0_11], %14 {strides = array<i32>} : memref<1x32x128xf32, #tpu.memory_space<vmem>>, vector<1x32x128xf32>,
    return
  }
  func.func @transform_0(%arg0: i32, %arg1: i32) -> (i32, i32, i32) {
    %c0_i32 = arith.constant 0 : i32
    %c0_i32_0 = arith.constant 0 : i32
    return %arg0, %c0_i32, %arg1 : i32, i32, i32
  }
  func.func @transform_1(%arg0: i32, %arg1: i32) -> (i32, i32) {
    %c0_i32 = arith.constant 0 : i32
    %c0_i32_0 = arith.constant 0 : i32
    %c0_i32_1 = arith.constant 0 : i32
    return %c0_i32, %c0_i32_0 : i32, i32
  }
  func.func @transform_2(%arg0: i32, %arg1: i32) -> (i32, i32) {
    %c0_i32 = arith.constant 0 : i32
    %c0_i32_0 = arith.constant 0 : i32
    %c0_i32_1 = arith.constant 0 : i32
    return %c0_i32, %c0_i32_0 : i32, i32
  }
  func.func @transform_3(%arg0: i32, %arg1: i32) -> (i32, i32) {
    %c0_i32 = arith.constant 0 : i32
    %c0_i32_0 = arith.constant 0 : i32
    %c0_i32_1 = arith.constant 0 : i32
    return %c0_i32, %c0_i32_0 : i32, i32
  }
  func.func @transform_4(%arg0: i32, %arg1: i32) -> (i32, i32, i32) {
    %c0_i32 = arith.constant 0 : i32
    %c0_i32_0 = arith.constant 0 : i32
    return %arg0, %c0_i32, %arg1 : i32, i32, i32
  }
}

</mosaic_0001>

<llo_original>
// kernel: tile.18
$region0: #{tile.18}
  #allocation0 [shape = 's32[1]{0}', space=sflag, size = 0x4, scoped, tag = 'scoped memory for tile.18']
  %s0 = inlined_call_operand.vmem [shape: f32[8], index: 0, kind: input, shape index: {}]
  %s1 = inlined_call_operand.vmem [shape: f32[4,8], index: 1, kind: output, shape index: {}]
  // Predicated region
  $region2: #{tile.18} parent=0 // pred_check
    _
  $region3: #{tile.18} parent=0 // pred_check_branch
    %3 = sbr.rel (0) target = $region5
  $region4: #{tile.18} parent=0 // pred_region
    _
  $region5: #{tile.18} parent=0 // pred_fallthru
    _
  %v4 = vld [vmem:[%s0] ss:$0 sm:$0xff]
  %5 = vst [vmem:[%s1] sm:$0xf] %v4

// kernel: tile.0
$region0: #{tile.0}
  %s0 = inlined_call_operand.vmem [shape: f32[4,8], index: 0, kind: input, shape index: {}]
  %s1 = inlined_call_operand.vmem [shape: f32[32,1], index: 1, kind: output, shape index: {}]
  $region1: #{tile.0} parent=0
    #allocation0 [shape = 'u8[4096]{0}', space=vmem, size = 0x1000, scoped, tag = 'scoped mem for input reshape']
    %s3 = sshll.u32 1, 4
    %s4 = ssub.s32 %s3, 1
    %v5 = vld [vmem:[%s0] sm:%s4]
    %6 = vst [vmem:[#allocation0] sm:%s4] %v5
    %v7 = vld [vmem:[#allocation0] sm:$0xf]
    %vm8 = vcmask 7168
    %9 = vst.msk [vmem:[%s1] ss:$8 sm:$0xf] %vm8, %v7
    %v10 = vld [vmem:[#allocation0] sm:$0xf]
    %11 = vrot.lane.b32.xlu0 %v10, 127
    %v12 = vpop.permute.xlu0 %11
    %vm13 = vcmask 7168
    %s14 = scalar_lea.vmem %s1, 1
    %15 = vst.msk [vmem:[%s14] ss:$8 sm:$0xf] %vm13, %v12
    %v16 = vld [vmem:[#allocation0] sm:$0xf]
    %17 = vrot.lane.b32.xlu0 %v16, 126
    %v18 = vpop.permute.xlu0 %17
    %vm19 = vcmask 7168
    %s20 = scalar_lea.vmem %s1, 2
    %21 = vst.msk [vmem:[%s20] ss:$8 sm:$0xf] %vm19, %v18
    %v22 = vld [vmem:[#allocation0] sm:$0xf]
    %23 = vrot.lane.b32.xlu0 %v22, 125
    %v24 = vpop.permute.xlu0 %23
    %vm25 = vcmask 7168
    %s26 = scalar_lea.vmem %s1, 3
    %27 = vst.msk [vmem:[%s26] ss:$8 sm:$0xf] %vm25, %v24
    %v28 = vld [vmem:[#allocation0] sm:$0xf]
    %29 = vrot.lane.b32.xlu0 %v28, 124
    %v30 = vpop.permute.xlu0 %29
    %vm31 = vcmask 7168
    %s32 = scalar_lea.vmem %s1, 4
    %33 = vst.msk [vmem:[%s32] ss:$8 sm:$0xf] %vm31, %v30
    %v34 = vld [vmem:[#allocation0] sm:$0xf]
    %35 = vrot.lane.b32.xlu0 %v34, 123
    %v36 = vpop.permute.xlu0 %35
    %vm37 = vcmask 7168
    %s38 = scalar_lea.vmem %s1, 5
    %39 = vst.msk [vmem:[%s38] ss:$8 sm:$0xf] %vm37, %v36
    %v40 = vld [vmem:[#allocation0] sm:$0xf]
    %41 = vrot.lane.b32.xlu0 %v40, 122
    %v42 = vpop.permute.xlu0 %41
    %vm43 = vcmask 7168
    %s44 = scalar_lea.vmem %s1, 6
    %45 = vst.msk [vmem:[%s44] ss:$8 sm:$0xf] %vm43, %v42
    %v46 = vld [vmem:[#allocation0] sm:$0xf]
    %47 = vrot.lane.b32.xlu0 %v46, 121
    %v48 = vpop.permute.xlu0 %47
    %vm49 = vcmask 7168
    %s50 = scalar_lea.vmem %s1, 7
    %51 = vst.msk [vmem:[%s50] ss:$8 sm:$0xf] %vm49, %v48

// kernel: conv_transpose_block.2
$region0: #{conv_transpose_block.2}
  #allocation0 [shape = 'u32[]', space=smem, size = 0x4, offset = 0x4, fixed_abs, tag = 'smem constant byte address 0x4 - core index']
  #allocation1 [shape = 'u32[144,128]{1,0:T(1,128)}', space=vmem, size = 0x12000, scoped, tag = 'internal scratch']
  %s0 = inlined_call_operand.vmem [shape: f32[2,4,256], index: 0, kind: input, shape index: {}]
  %s1 = inlined_call_operand.vmem [shape: f32[4,1], index: 1, kind: output, shape index: {0}]
  %s2 = inlined_call_operand.vmem [shape: f32[4,4], index: 2, kind: output, shape index: {1}]
  %3 = xla_tuple %s1, %s2
  %s4 = sld [smem:[#allocation0]]
  $region49: #{conv_transpose_block.2} parent=0
    _
  %s6 = ssub.s32 1, %s4
  %s7 = scalar_select 0, %s6, %s4
  loop: start=0, step=1, limit=6
  $region2: #{conv_transpose_block.2} parent=0 // loop_pre_header
    _
  $region3: #{conv_transpose_block.2} parent=0 // loop_header
    %s9 = sphi 0, %s13
    %p10 = scmp.ge.s32.totalorder %s9, 6
    %s16 = sphi 0, %s28
    %s17 = sphi 0, %s24
    %s18 = sphi 0, %s16
    %s19 = sphi 0, %s17
    %s20 = sphi 0, %s18
    %s21 = sphi 0, %s19
    %s33 = sphi 0, %s35
    %s36 = sphi 0, %s33
    %s37 = sphi 0, %s36
    %s53 = sphi 0, %s37
    %s57 = sphi 0, %s57
    %s59 = sphi 0, %s57
    %s60 = sphi 0, %s59
    %s74 = sphi 0, %s60
    %s78 = sphi 0, %s78
    %s80 = sphi 0, %s78
    %s81 = sphi 0, %s80
    %s95 = sphi 0, %s81
  $region4: #{conv_transpose_block.2} parent=0 // loop_header_branch
    %12 = sbr.rel (%p10) target = $region8
  $region5: #{conv_transpose_block.2} parent=0 // loop_body
    %s14 = ssub.s32 %s9, 1
    %s15 = ssub.s32 %s9, 2
    %s22 = sadd.s32 1, %s17
    %p23 = scmp.ge.s32.totalorder %s22, 2
    %s24 = scalar_select %p23, 0, %s22
    %s25 = sadd.s32 1, %s16
    %s26 = scalar_select %p23, %s25, %s16
    %p27 = scmp.ge.s32.totalorder %s26, 2
    %s28 = scalar_select %p27, 0, %s26
    %s29 = ssub.s32 %s16, %s28
    %s30 = ssub.s32 %s17, %s24
    %s31 = sor.u32 %s29, %s30
    %p32 = scmp.eq.s32.totalorder %s31, 0
    %s34 = sadd.s32 %s33, 1
    %s35 = scalar_select %p32, %s33, %s34
    %p38 = pneg %p32
    %p39 = scmp.eq.s32.totalorder %s9, 3
    %p40 = por %p38, %p39
    %p41 = scmp.ne.s32.totalorder %s33, %s36
    %p42 = scmp.eq.s32.totalorder %s9, 0
    %p43 = por %p41, %p42
    %p44 = scmp.ne.s32.totalorder %s33, %s36
    %p45 = scmp.eq.s32.totalorder %s14, 3
    %p46 = por %p44, %p45
    %p47 = scmp.ne.s32.totalorder %s36, %s37
    %p48 = scmp.eq.s32.totalorder %s14, 0
    %p49 = por %p47, %p48
    %p50 = scmp.ne.s32.totalorder %s36, %s37
    %p51 = scmp.eq.s32.totalorder %s15, 3
    %p52 = por %p50, %p51
    %p54 = scmp.ne.s32.totalorder %s37, %s53
    %p55 = scmp.eq.s32.totalorder %s15, 0
    %p56 = por %p54, %p55
    %s58 = sadd.s32 %s57, 1
    %p61 = scmp.eq.s32.totalorder %s9, 3
    %p62 = scmp.ne.s32.totalorder %s57, %s59
    %p63 = scmp.eq.s32.totalorder %s9, 0
    %p64 = por %p62, %p63
    %p65 = scmp.ne.s32.totalorder %s57, %s59
    %p66 = scmp.eq.s32.totalorder %s14, 3
    %p67 = por %p65, %p66
    %p68 = scmp.ne.s32.totalorder %s59, %s60
    %p69 = scmp.eq.s32.totalorder %s14, 0
    %p70 = por %p68, %p69
    %p71 = scmp.ne.s32.totalorder %s59, %s60
    %p72 = scmp.eq.s32.totalorder %s15, 3
    %p73 = por %p71, %p72
    %p75 = scmp.ne.s32.totalorder %s60, %s74
    %p76 = scmp.eq.s32.totalorder %s15, 0
    %p77 = por %p75, %p76
    %s79 = sadd.s32 %s78, 1
    %p82 = scmp.eq.s32.totalorder %s9, 3
    %p83 = scmp.ne.s32.totalorder %s78, %s80
    %p84 = scmp.eq.s32.totalorder %s9, 0
    %p85 = por %p83, %p84
    %p86 = scmp.ne.s32.totalorder %s78, %s80
    %p87 = scmp.eq.s32.totalorder %s14, 3
    %p88 = por %p86, %p87
    %p89 = scmp.ne.s32.totalorder %s80, %s81
    %p90 = scmp.eq.s32.totalorder %s14, 0
    %p91 = por %p89, %p90
    %p92 = scmp.ne.s32.totalorder %s80, %s81
    %p93 = scmp.eq.s32.totalorder %s15, 3
    %p94 = por %p92, %p93
    %p96 = scmp.ne.s32.totalorder %s81, %s95
    %p97 = scmp.eq.s32.totalorder %s15, 0
    %p98 = por %p96, %p97
    %p99 = scmp.le.s32.totalorder 1, %s9
    %p100 = scmp.lt.s32.totalorder %s9, 5
    %p101 = pnand %p99, %p100
    %p102 = pneg %p101
    // Predicated region
    $region9: #{conv_transpose_block.2} parent=5 // pred_check
      _
    $region10: #{conv_transpose_block.2} parent=5 // pred_check_branch
      %104 = sbr.rel (%p101) target = $region12
    $region11: #{conv_transpose_block.2} parent=5 // pred_region
      %s105 = ssub.s32 %s9, 1
    $region12: #{conv_transpose_block.2} parent=5 // pred_fallthru
      _
    %p106 = scmp.lt.s32.totalorder %s9, 4
    // Predicated region
    $region13: #{conv_transpose_block.2} parent=5 // pred_check
      %p107 = pneg %p106
    $region14: #{conv_transpose_block.2} parent=5 // pred_check_branch
      %109 = sbr.rel (%p107) target = $region16
    $region15: #{conv_transpose_block.2} parent=5 // pred_region
      // Predicated region
      $region17: #{conv_transpose_block.2} parent=15 // pred_check
        %p110 = pneg %p43
      $region18: #{conv_transpose_block.2} parent=15 // pred_check_branch
        %112 = sbr.rel (%p110) target = $region20
      $region19: #{conv_transpose_block.2} parent=15 // pred_region
        %p113 = scmp.lt.s32.totalorder %s16, 1
        %s114 = scalar_select %p113, %s16, 1
        %p115 = scmp.lt.s32.totalorder %s17, 1
        %s116 = scalar_select %p115, %s17, 1
        %s117 = smul.addr %s114, 2
        %s118 = sadd.s32 %s116, %s117
        %s119 = smul.addr %s118, 4
        %s120 = scalar_lea.vmem %s0, %s119
      $region20: #{conv_transpose_block.2} parent=15 // pred_fallthru
        _
    $region16: #{conv_transpose_block.2} parent=5 // pred_fallthru
      _
    %p121 = scmp.le.s32.totalorder 1, %s9
    %p122 = scmp.lt.s32.totalorder %s9, 5
    %p123 = pnand %p121, %p122
    %p124 = pneg %p123
    // Predicated region
    $region21: #{conv_transpose_block.2} parent=5 // pred_check
      _
    $region22: #{conv_transpose_block.2} parent=5 // pred_check_branch
      %126 = sbr.rel (%p123) target = $region24
    $region23: #{conv_transpose_block.2} parent=5 // pred_region
      %s127 = ssub.s32 %s9, 1
      %p128 = scmp.lt.s32.totalorder %s18, 1
      %s129 = scalar_select %p128, %s18, 1
      %p130 = scmp.lt.s32.totalorder %s19, 1
      %s131 = scalar_select %p130, %s19, 1
      %s132 = smul.addr %s129, 2
      %s133 = sadd.s32 %s131, %s132
      %s134 = smul.addr %s133, 4
      %s135 = scalar_lea.vmem %s0, %s134
      %p136 = pneg %p49
      %p137 = pneg %p46
      %p138 = pneg %p70
      %p139 = pneg %p67
      %p140 = pneg %p91
      %p141 = pneg %p88
      %p142 = scmp.lt.s32.totalorder %s18, 1
      %s143 = scalar_select %p142, %s18, 1
      %p144 = scmp.lt.s32.totalorder %s19, 1
      %s145 = scalar_select %p144, %s19, 1
      %s146 = smul.addr %s143, 2
      %s147 = sadd.s32 %s145, %s146
      %s148 = smul.addr %s147, 4
      %s149 = scalar_lea.vmem %s0, %s148
      %p150 = scmp.eq.s32.totalorder %s18, 0
      %p151 = scmp.eq.s32.totalorder %s19, 0
      %p152 = pnand %p150, %p151
      %p153 = pneg %p152
      // Predicated region
      $region25: #{conv_transpose_block.2} parent=23 // pred_check
        _
      $region26: #{conv_transpose_block.2} parent=23 // pred_check_branch
        %155 = sbr.rel (%p152) target = $region28
      $region27: #{conv_transpose_block.2} parent=23 // pred_region
        %vm156 = vcmask 3072
        %157 = vst.msk [vmem:[%s1] sm:$0xf] %vm156, 0.0
        %vm158 = vcmask 27648
        %159 = vst.msk [vmem:[%s2] sm:$0xf] %vm158, 0.0
      $region28: #{conv_transpose_block.2} parent=23 // pred_fallthru
        _
      %v160 = vld [vmem:[%s149] sm:$0xf]
      %v161 = vld [vmem:[%s1] sm:$0xf]
      %vm162 = vcmask 1043456
      %v163 = vsel %vm162, %v160, 0.0
      %164 = vadd.xlane.f32.xlu0 %v163
      %v165 = vpop.xlane.xlu0 %164
      %v166 = vadd.f32 %v161, %v165
      %vm167 = vcmask 3072
      %168 = vst.msk [vmem:[%s1] sm:$0xf] %vm167, %v166
      %v169 = vld [vmem:[%s2] sm:$0xf]
      %170 = vmatprep.subr.mxu0 0.0
      %171 = vmatpush1.xpose.msra.mxu0 0.0
      %172 = vmatprep.subr.mxu0 0.0
      %173 = vmatpush1.xpose.msra.mxu0 0.0
      %174 = vmatprep.subr.mxu0 0.0
      %175 = vmatpush1.xpose.msra.mxu0 0.0
      %176 = vmatprep.subr.mxu0 0.0
      %177 = vmatpush1.xpose.msra.mxu0 0.0
      %178 = vmatprep.subr.mxu0 0.0
      %179 = vmatpush1.xpose.msra.mxu0 0.0
      %180 = vmatprep.subr.mxu0 0.0
      %181 = vmatpush1.xpose.msra.mxu0 0.0
      %182 = vmatprep.subr.mxu0 0.0
      %183 = vmatpush1.xpose.msra.mxu0 0.0
      %184 = vmatprep.subr.mxu0 0.0
      %185 = vmatpush1.xpose.msra.mxu0 0.0
      %186 = vmatprep.subr.mxu0 0.0
      %187 = vmatpush1.xpose.msra.mxu0 0.0
      %188 = vmatprep.subr.mxu0 0.0
      %189 = vmatpush1.xpose.msra.mxu0 0.0
      %190 = vmatprep.subr.mxu0 0.0
      %191 = vmatpush1.xpose.msra.mxu0 0.0
      %192 = vmatprep.subr.mxu0 0.0
      %193 = vmatpush1.xpose.msra.mxu0 0.0
      %194 = vmatprep.subr.mxu0 0.0
      %195 = vmatpush1.xpose.msra.mxu0 0.0
      %196 = vmatprep.subr.mxu0 0.0
      %197 = vmatpush1.xpose.msra.mxu0 0.0
      %198 = vmatprep.subr.mxu0 0.0
      %199 = vmatpush1.xpose.msra.mxu0 0.0
      %200 = vmatprep.subr.mxu0 0.0
      %201 = vmatpush1.xpose.msra.mxu0 %v160
      %202 = vmatprep.subr.mxu0 0.0
      %203 = vmatpush2.xpose.msra.mxu0 0.0
      %204 = vmatprep.subr.mxu0 0.0
      %205 = vmatpush2.xpose.msra.mxu0 0.0
      %206 = vmatprep.subr.mxu0 0.0
      %207 = vmatpush2.xpose.msra.mxu0 0.0
      %208 = vmatprep.subr.mxu0 0.0
      %209 = vmatpush2.xpose.msra.mxu0 0.0
      %210 = vmatprep.subr.mxu0 0.0
      %211 = vmatpush2.xpose.msra.mxu0 0.0
      %212 = vmatprep.subr.mxu0 0.0
      %213 = vmatpush2.xpose.msra.mxu0 0.0
      %214 = vmatprep.subr.mxu0 0.0
      %215 = vmatpush2.xpose.msra.mxu0 0.0
      %216 = vmatprep.subr.mxu0 0.0
      %217 = vmatpush2.xpose.msra.mxu0 0.0
      %218 = vmatprep.subr.mxu0 0.0
      %219 = vmatpush2.xpose.msra.mxu0 0.0
      %220 = vmatprep.subr.mxu0 0.0
      %221 = vmatpush2.xpose.msra.mxu0 0.0
      %222 = vmatprep.subr.mxu0 0.0
      %223 = vmatpush2.xpose.msra.mxu0 0.0
      %224 = vmatprep.subr.mxu0 0.0
      %225 = vmatpush2.xpose.msra.mxu0 0.0
      %226 = vmatprep.subr.mxu0 0.0
      %227 = vmatpush2.xpose.msra.mxu0 0.0
      %228 = vmatprep.subr.mxu0 0.0
      %229 = vmatpush2.xpose.msra.mxu0 0.0
      %230 = vmatprep.subr.mxu0 0.0
      %231 = vmatpush2.xpose.msra.mxu0 0.0
      %232 = vmatprep.subr.mxu0 0.0
      %233 = vmatpush2.xpose.msra.mxu0 0.0
      %234 = vmatprep.mubr.f32.mxu0 0.0
      %235 = vmatmul.mubr.f32.gmra.mxu0 %v160
      %v236 = vpop.f32.mrf.mxu0
      %v237 = vadd.f32 0.0, %v236
      %v238 = vpop.f32.mrf.mxu0
      %239 = vdwg.mxu0
      %v240 = vadd.f32 %v169, %v237
      %vm241 = vcmask 27648
      %242 = vst.msk [vmem:[%s2] sm:$0xf] %vm241, %v240
      // Predicated region
      $region29: #{conv_transpose_block.2} parent=23 // pred_check
        %p243 = pneg %p67
      $region30: #{conv_transpose_block.2} parent=23 // pred_check_branch
        %245 = sbr.rel (%p243) target = $region32
      $region31: #{conv_transpose_block.2} parent=23 // pred_region
        _
      $region32: #{conv_transpose_block.2} parent=23 // pred_fallthru
        _
      // Predicated region
      $region33: #{conv_transpose_block.2} parent=23 // pred_check
        %p246 = pneg %p88
      $region34: #{conv_transpose_block.2} parent=23 // pred_check_branch
        %248 = sbr.rel (%p246) target = $region36
      $region35: #{conv_transpose_block.2} parent=23 // pred_region
        _
      $region36: #{conv_transpose_block.2} parent=23 // pred_fallthru
        _
      // Predicated region
      $region37: #{conv_transpose_block.2} parent=23 // pred_check
        %p249 = pneg %p67
      $region38: #{conv_transpose_block.2} parent=23 // pred_check_branch
        %251 = sbr.rel (%p249) target = $region40
      $region39: #{conv_transpose_block.2} parent=23 // pred_region
        _
      $region40: #{conv_transpose_block.2} parent=23 // pred_fallthru
        _
      // Predicated region
      $region41: #{conv_transpose_block.2} parent=23 // pred_check
        %p252 = pneg %p88
      $region42: #{conv_transpose_block.2} parent=23 // pred_check_branch
        %254 = sbr.rel (%p252) target = $region44
      $region43: #{conv_transpose_block.2} parent=23 // pred_region
        _
      $region44: #{conv_transpose_block.2} parent=23 // pred_fallthru
        _
    $region24: #{conv_transpose_block.2} parent=5 // pred_fallthru
      _
    %p255 = scmp.le.s32.totalorder 2, %s9
    // Predicated region
    $region45: #{conv_transpose_block.2} parent=5 // pred_check
      %p256 = pneg %p255
    $region46: #{conv_transpose_block.2} parent=5 // pred_check_branch
      %258 = sbr.rel (%p256) target = $region48
    $region47: #{conv_transpose_block.2} parent=5 // pred_region
      %s259 = ssub.s32 %s9, 2
    $region48: #{conv_transpose_block.2} parent=5 // pred_fallthru
      _
  $region6: #{conv_transpose_block.2} parent=0 // loop_footer
    %s13 = sadd.s32 1, %s9
  $region7: #{conv_transpose_block.2} parent=0 // loop_footer_branch
    %8 = sbr.rel target = $region3
  $region8: #{conv_transpose_block.2} parent=0 // loop_exit
    _

// kernel: conv_transpose_block.3
$region0: #{conv_transpose_block.3}
  #allocation0 [shape = 'u32[]', space=smem, size = 0x4, offset = 0x4, fixed_abs, tag = 'smem constant byte address 0x4 - core index']
  #allocation1 [shape = 'u32[144,128]{1,0:T(1,128)}', space=vmem, size = 0x12000, scoped, tag = 'internal scratch']
  %s0 = inlined_call_operand.vmem [shape: f32[2,4,256], index: 0, kind: input, shape index: {}]
  %s1 = inlined_call_operand.vmem [shape: f32[32,4], index: 1, kind: input, shape index: {}]
  %s2 = inlined_call_operand.vmem [shape: f32[32,1], index: 2, kind: input, shape index: {}]
  %s3 = inlined_call_operand.vmem [shape: f32[32,1], index: 3, kind: input, shape index: {}]
  %s4 = inlined_call_operand.vmem [shape: f32[2,32,256], index: 4, kind: output, shape index: {}]
  %s5 = sld [smem:[#allocation0]]
  $region83: #{conv_transpose_block.3} parent=0
    _
  %s7 = ssub.s32 1, %s5
  %s8 = scalar_select 0, %s7, %s5
  $region1: #{conv_transpose_block.3} parent=0
    #allocation2 [shape = 'u8[32768]{0}', space=vmem, size = 0x8000, scoped, tag = 'output window, operand 0']
    loop: start=0, step=1, limit=6
    $region2: #{conv_transpose_block.3} parent=1 // loop_pre_header
      _
    $region3: #{conv_transpose_block.3} parent=1 // loop_header
      %s10 = sphi 0, %s14
      %p11 = scmp.ge.s32.totalorder %s10, 6
      %s17 = sphi 0, %s29
      %s18 = sphi 0, %s25
      %s19 = sphi 0, %s17
      %s20 = sphi 0, %s18
      %s21 = sphi 0, %s19
      %s22 = sphi 0, %s20
      %s34 = sphi 0, %s36
      %s37 = sphi 0, %s34
      %s38 = sphi 0, %s37
      %s54 = sphi 0, %s38
      %s58 = sphi 0, %s58
      %s60 = sphi 0, %s58
      %s61 = sphi 0, %s60
      %s75 = sphi 0, %s61
      %s79 = sphi 0, %s79
      %s81 = sphi 0, %s79
      %s82 = sphi 0, %s81
      %s96 = sphi 0, %s82
      %s100 = sphi 0, %s100
      %s102 = sphi 0, %s100
      %s103 = sphi 0, %s102
      %s117 = sphi 0, %s103
      %s125 = sphi 0, %s127
      %s128 = sphi 0, %s125
      %s129 = sphi 0, %s128
      %s145 = sphi 0, %s129
    $region4: #{conv_transpose_block.3} parent=1 // loop_header_branch
      %13 = sbr.rel (%p11) target = $region8
    $region5: #{conv_transpose_block.3} parent=1 // loop_body
      %s15 = ssub.s32 %s10, 1
      %s16 = ssub.s32 %s10, 2
      %s23 = sadd.s32 1, %s18
      %p24 = scmp.ge.s32.totalorder %s23, 2
      %s25 = scalar_select %p24, 0, %s23
      %s26 = sadd.s32 1, %s17
      %s27 = scalar_select %p24, %s26, %s17
      %p28 = scmp.ge.s32.totalorder %s27, 2
      %s29 = scalar_select %p28, 0, %s27
      %s30 = ssub.s32 %s17, %s29
      %s31 = ssub.s32 %s18, %s25
      %s32 = sor.u32 %s30, %s31
      %p33 = scmp.eq.s32.totalorder %s32, 0
      %s35 = sadd.s32 %s34, 1
      %s36 = scalar_select %p33, %s34, %s35
      %p39 = pneg %p33
      %p40 = scmp.eq.s32.totalorder %s10, 3
      %p41 = por %p39, %p40
      %p42 = scmp.ne.s32.totalorder %s34, %s37
      %p43 = scmp.eq.s32.totalorder %s10, 0
      %p44 = por %p42, %p43
      %p45 = scmp.ne.s32.totalorder %s34, %s37
      %p46 = scmp.eq.s32.totalorder %s15, 3
      %p47 = por %p45, %p46
      %p48 = scmp.ne.s32.totalorder %s37, %s38
      %p49 = scmp.eq.s32.totalorder %s15, 0
      %p50 = por %p48, %p49
      %p51 = scmp.ne.s32.totalorder %s37, %s38
      %p52 = scmp.eq.s32.totalorder %s16, 3
      %p53 = por %p51, %p52
      %p55 = scmp.ne.s32.totalorder %s38, %s54
      %p56 = scmp.eq.s32.totalorder %s16, 0
      %p57 = por %p55, %p56
      %s59 = sadd.s32 %s58, 1
      %p62 = scmp.eq.s32.totalorder %s10, 3
      %p63 = scmp.ne.s32.totalorder %s58, %s60
      %p64 = scmp.eq.s32.totalorder %s10, 0
      %p65 = por %p63, %p64
      %p66 = scmp.ne.s32.totalorder %s58, %s60
      %p67 = scmp.eq.s32.totalorder %s15, 3
      %p68 = por %p66, %p67
      %p69 = scmp.ne.s32.totalorder %s60, %s61
      %p70 = scmp.eq.s32.totalorder %s15, 0
      %p71 = por %p69, %p70
      %p72 = scmp.ne.s32.totalorder %s60, %s61
      %p73 = scmp.eq.s32.totalorder %s16, 3
      %p74 = por %p72, %p73
      %p76 = scmp.ne.s32.totalorder %s61, %s75
      %p77 = scmp.eq.s32.totalorder %s16, 0
      %p78 = por %p76, %p77
      %s80 = sadd.s32 %s79, 1
      %p83 = scmp.eq.s32.totalorder %s10, 3
      %p84 = scmp.ne.s32.totalorder %s79, %s81
      %p85 = scmp.eq.s32.totalorder %s10, 0
      %p86 = por %p84, %p85
      %p87 = scmp.ne.s32.totalorder %s79, %s81
      %p88 = scmp.eq.s32.totalorder %s15, 3
      %p89 = por %p87, %p88
      %p90 = scmp.ne.s32.totalorder %s81, %s82
      %p91 = scmp.eq.s32.totalorder %s15, 0
      %p92 = por %p90, %p91
      %p93 = scmp.ne.s32.totalorder %s81, %s82
      %p94 = scmp.eq.s32.totalorder %s16, 3
      %p95 = por %p93, %p94
      %p97 = scmp.ne.s32.totalorder %s82, %s96
      %p98 = scmp.eq.s32.totalorder %s16, 0
      %p99 = por %p97, %p98
      %s101 = sadd.s32 %s100, 1
      %p104 = scmp.eq.s32.totalorder %s10, 3
      %p105 = scmp.ne.s32.totalorder %s100, %s102
      %p106 = scmp.eq.s32.totalorder %s10, 0
      %p107 = por %p105, %p106
      %p108 = scmp.ne.s32.totalorder %s100, %s102
      %p109 = scmp.eq.s32.totalorder %s15, 3
      %p110 = por %p108, %p109
      %p111 = scmp.ne.s32.totalorder %s102, %s103
      %p112 = scmp.eq.s32.totalorder %s15, 0
      %p113 = por %p111, %p112
      %p114 = scmp.ne.s32.totalorder %s102, %s103
      %p115 = scmp.eq.s32.totalorder %s16, 3
      %p116 = por %p114, %p115
      %p118 = scmp.ne.s32.totalorder %s103, %s117
      %p119 = scmp.eq.s32.totalorder %s16, 0
      %p120 = por %p118, %p119
      %s121 = ssub.s32 %s17, %s29
      %s122 = ssub.s32 %s18, %s25
      %s123 = sor.u32 %s121, %s122
      %p124 = scmp.eq.s32.totalorder %s123, 0
      %s126 = sadd.s32 %s125, 1
      %s127 = scalar_select %p124, %s125, %s126
      %p130 = pneg %p124
      %p131 = scmp.eq.s32.totalorder %s10, 3
      %p132 = por %p130, %p131
      %p133 = scmp.ne.s32.totalorder %s125, %s128
      %p134 = scmp.eq.s32.totalorder %s10, 0
      %p135 = por %p133, %p134
      %p136 = scmp.ne.s32.totalorder %s125, %s128
      %p137 = scmp.eq.s32.totalorder %s15, 3
      %p138 = por %p136, %p137
      %p139 = scmp.ne.s32.totalorder %s128, %s129
      %p140 = scmp.eq.s32.totalorder %s15, 0
      %p141 = por %p139, %p140
      %p142 = scmp.ne.s32.totalorder %s128, %s129
      %p143 = scmp.eq.s32.totalorder %s16, 3
      %p144 = por %p142, %p143
      %p146 = scmp.ne.s32.totalorder %s129, %s145
      %p147 = scmp.eq.s32.totalorder %s16, 0
      %p148 = por %p146, %p147
      %p149 = scmp.le.s32.totalorder 1, %s10
      %p150 = scmp.lt.s32.totalorder %s10, 5
      %p151 = pnand %p149, %p150
      %p152 = pneg %p151
      // Predicated region
      $region9: #{conv_transpose_block.3} parent=5 // pred_check
        _
      $region10: #{conv_transpose_block.3} parent=5 // pred_check_branch
        %154 = sbr.rel (%p151) target = $region12
      $region11: #{conv_transpose_block.3} parent=5 // pred_region
        %s155 = ssub.s32 %s10, 1
        // Predicated region
        $region13: #{conv_transpose_block.3} parent=11 // pred_check
          %p156 = pneg %p71
        $region14: #{conv_transpose_block.3} parent=11 // pred_check_branch
          %158 = sbr.rel (%p156) target = $region16
        $region15: #{conv_transpose_block.3} parent=11 // pred_region
          _
        $region16: #{conv_transpose_block.3} parent=11 // pred_fallthru
          _
        // Predicated region
        $region17: #{conv_transpose_block.3} parent=11 // pred_check
          %p159 = pneg %p92
        $region18: #{conv_transpose_block.3} parent=11 // pred_check_branch
          %161 = sbr.rel (%p159) target = $region20
        $region19: #{conv_transpose_block.3} parent=11 // pred_region
          _
        $region20: #{conv_transpose_block.3} parent=11 // pred_fallthru
          _
        // Predicated region
        $region21: #{conv_transpose_block.3} parent=11 // pred_check
          %p162 = pneg %p113
        $region22: #{conv_transpose_block.3} parent=11 // pred_check_branch
          %164 = sbr.rel (%p162) target = $region24
        $region23: #{conv_transpose_block.3} parent=11 // pred_region
          _
        $region24: #{conv_transpose_block.3} parent=11 // pred_fallthru
          _
      $region12: #{conv_transpose_block.3} parent=5 // pred_fallthru
        _
      %p165 = scmp.lt.s32.totalorder %s10, 4
      // Predicated region
      $region25: #{conv_transpose_block.3} parent=5 // pred_check
        %p166 = pneg %p165
      $region26: #{conv_transpose_block.3} parent=5 // pred_check_branch
        %168 = sbr.rel (%p166) target = $region28
      $region27: #{conv_transpose_block.3} parent=5 // pred_region
        // Predicated region
        $region29: #{conv_transpose_block.3} parent=27 // pred_check
          %p169 = pneg %p44
        $region30: #{conv_transpose_block.3} parent=27 // pred_check_branch
          %171 = sbr.rel (%p169) target = $region32
        $region31: #{conv_transpose_block.3} parent=27 // pred_region
          %p172 = scmp.lt.s32.totalorder %s17, 1
          %s173 = scalar_select %p172, %s17, 1
          %p174 = scmp.lt.s32.totalorder %s18, 1
          %s175 = scalar_select %p174, %s18, 1
          %s176 = smul.addr %s173, 2
          %s177 = sadd.s32 %s175, %s176
          %s178 = smul.addr %s177, 4
          %s179 = scalar_lea.vmem %s0, %s178
        $region32: #{conv_transpose_block.3} parent=27 // pred_fallthru
          _
      $region28: #{conv_transpose_block.3} parent=5 // pred_fallthru
        _
      %p180 = scmp.le.s32.totalorder 1, %s10
      %p181 = scmp.lt.s32.totalorder %s10, 5
      %p182 = pnand %p180, %p181
      %p183 = pneg %p182
      // Predicated region
      $region33: #{conv_transpose_block.3} parent=5 // pred_check
        _
      $region34: #{conv_transpose_block.3} parent=5 // pred_check_branch
        %185 = sbr.rel (%p182) target = $region36
      $region35: #{conv_transpose_block.3} parent=5 // pred_region
        %s186 = ssub.s32 %s10, 1
        %p187 = scmp.lt.s32.totalorder %s19, 1
        %s188 = scalar_select %p187, %s19, 1
        %p189 = scmp.lt.s32.totalorder %s20, 1
        %s190 = scalar_select %p189, %s20, 1
        %s191 = smul.addr %s188, 2
        %s192 = sadd.s32 %s190, %s191
        %s193 = smul.addr %s192, 4
        %s194 = scalar_lea.vmem %s0, %s193
        %p195 = pneg %p50
        %p196 = pneg %p47
        %p197 = pneg %p71
        %p198 = pneg %p68
        %p199 = pneg %p92
        %p200 = pneg %p89
        %p201 = pneg %p113
        %p202 = pneg %p110
        %p203 = pneg %p141
        %p204 = pneg %p138
        %s205 = sand.u32 %s128, 1
        %s206 = sand.u32 %s128, 1
        %s207 = smul.addr %s206, 32
        %s208 = scalar_lea.vmem [#allocation2], %s207
        %p209 = scmp.lt.s32.totalorder %s19, 1
        %s210 = scalar_select %p209, %s19, 1
        %p211 = scmp.lt.s32.totalorder %s20, 1
        %s212 = scalar_select %p211, %s20, 1
        %s213 = smul.addr %s210, 2
        %s214 = sadd.s32 %s212, %s213
        %s215 = smul.addr %s214, 4
        %s216 = scalar_lea.vmem %s0, %s215
        %v217 = vld [vmem:[%s216] sm:$0xf]
        %v218 = vld [vmem:[%s1] sm:$0xff]
        %v219 = vld [vmem:[%s1 + $0x8] sm:$0xff]
        %v220 = vld [vmem:[%s1 + $0x10] sm:$0xff]
        %v221 = vld [vmem:[%s1 + $0x18] sm:$0xff]
        %vm222 = vcmask 31744
        %v224 = vsel %vm222, %v218, 0
        %v227 = vsel %vm222, %v219, 0
        %v230 = vsel %vm222, %v220, 0
        %v233 = vsel %vm222, %v221, 0
        %vm235 = vcmask 1043456
        %v237 = vsel %vm235, %v217, 0
        %239 = vmatprep.subr.mxu0 0.0
        %240 = vmatpush1.msra.mxu0 0.0
        %241 = vmatprep.subr.mxu0 0.0
        %242 = vmatpush1.msra.mxu0 0.0
        %243 = vmatprep.subr.mxu0 0.0
        %244 = vmatpush1.msra.mxu0 0.0
        %245 = vmatprep.subr.mxu0 0.0
        %246 = vmatpush1.msra.mxu0 0.0
        %247 = vmatprep.subr.mxu0 0.0
        %248 = vmatpush1.msra.mxu0 0.0
        %249 = vmatprep.subr.mxu0 0.0
        %250 = vmatpush1.msra.mxu0 0.0
        %251 = vmatprep.subr.mxu0 0.0
        %252 = vmatpush1.msra.mxu0 0.0
        %253 = vmatprep.subr.mxu0 0.0
        %254 = vmatpush1.msra.mxu0 0.0
        %255 = vmatprep.subr.mxu0 0.0
        %256 = vmatpush1.msra.mxu0 0.0
        %257 = vmatprep.subr.mxu0 0.0
        %258 = vmatpush1.msra.mxu0 0.0
        %259 = vmatprep.subr.mxu0 0.0
        %260 = vmatpush1.msra.mxu0 0.0
        %261 = vmatprep.subr.mxu0 0.0
        %262 = vmatpush1.msra.mxu0 0.0
        %263 = vmatprep.subr.mxu0 0.0
        %264 = vmatpush1.msra.mxu0 0.0
        %265 = vmatprep.subr.mxu0 0.0
        %266 = vmatpush1.msra.mxu0 0.0
        %267 = vmatprep.subr.mxu0 0.0
        %268 = vmatpush1.msra.mxu0 0.0
        %269 = vmatprep.subr.mxu0 0.0
        %270 = vmatpush1.msra.mxu0 %v237
        %271 = vmatprep.subr.mxu0 0.0
        %272 = vmatpush2.msra.mxu0 0.0
        %273 = vmatprep.subr.mxu0 0.0
        %274 = vmatpush2.msra.mxu0 0.0
        %275 = vmatprep.subr.mxu0 0.0
        %276 = vmatpush2.msra.mxu0 0.0
        %277 = vmatprep.subr.mxu0 0.0
        %278 = vmatpush2.msra.mxu0 0.0
        %279 = vmatprep.subr.mxu0 0.0
        %280 = vmatpush2.msra.mxu0 0.0
        %281 = vmatprep.subr.mxu0 0.0
        %282 = vmatpush2.msra.mxu0 0.0
        %283 = vmatprep.subr.mxu0 0.0
        %284 = vmatpush2.msra.mxu0 0.0
        %285 = vmatprep.subr.mxu0 0.0
        %286 = vmatpush2.msra.mxu0 0.0
        %287 = vmatprep.subr.mxu0 0.0
        %288 = vmatpush2.msra.mxu0 0.0
        %289 = vmatprep.subr.mxu0 0.0
        %290 = vmatpush2.msra.mxu0 0.0
        %291 = vmatprep.subr.mxu0 0.0
        %292 = vmatpush2.msra.mxu0 0.0
        %293 = vmatprep.subr.mxu0 0.0
        %294 = vmatpush2.msra.mxu0 0.0
        %295 = vmatprep.subr.mxu0 0.0
        %296 = vmatpush2.msra.mxu0 0.0
        %297 = vmatprep.subr.mxu0 0.0
        %298 = vmatpush2.msra.mxu0 0.0
        %299 = vmatprep.subr.mxu0 0.0
        %300 = vmatpush2.msra.mxu0 0.0
        %301 = vmatprep.subr.mxu0 0.0
        %302 = vmatpush2.msra.mxu0 0.0
        %303 = vmatprep.mubr.f32.mxu0 0.0
        %304 = vmatmul.mubr.f32.gmra.mxu0 %v224
        %v305 = vpop.f32.mrf.mxu0
        %v306 = vadd.f32 0.0, %v305
        %v307 = vpop.f32.mrf.mxu0
        %308 = vmatprep.mubr.f32.mxu0 0.0
        %309 = vmatmul.mubr.f32.gmra.mxu0 %v227
        %v310 = vpop.f32.mrf.mxu0
        %v311 = vadd.f32 0.0, %v310
        %v312 = vpop.f32.mrf.mxu0
        %313 = vmatprep.mubr.f32.mxu0 0.0
        %314 = vmatmul.mubr.f32.gmra.mxu0 %v230
        %v315 = vpop.f32.mrf.mxu0
        %v316 = vadd.f32 0.0, %v315
        %v317 = vpop.f32.mrf.mxu0
        %318 = vmatprep.mubr.f32.mxu0 0.0
        %319 = vmatmul.mubr.f32.gmra.mxu0 %v233
        %v320 = vpop.f32.mrf.mxu0
        %v321 = vadd.f32 0.0, %v320
        %v322 = vpop.f32.mrf.mxu0
        %323 = vdwg.mxu0
        %v324 = vld [vmem:[%s2] sm:$0xff]
        %v325 = vld [vmem:[%s2 + $0x8] sm:$0xff]
        %v326 = vld [vmem:[%s2 + $0x10] sm:$0xff]
        %v327 = vld [vmem:[%s2 + $0x18] sm:$0xff]
        %329 = vset.pattern.permute.xlu0 0
        %330 = vperm.xlu0 %329, %v324
        %v331 = vpop.permute.xlu0 %330
        %334 = vset.pattern.permute.xlu0 0
        %335 = vperm.xlu0 %334, %v325
        %v336 = vpop.permute.xlu0 %335
        %339 = vset.pattern.permute.xlu0 0
        %340 = vperm.xlu0 %339, %v326
        %v341 = vpop.permute.xlu0 %340
        %344 = vset.pattern.permute.xlu0 0
        %345 = vperm.xlu0 %344, %v327
        %v346 = vpop.permute.xlu0 %345
        %v348 = vmul.f32 %v306, %v331
        %v349 = vmul.f32 %v311, %v336
        %v350 = vmul.f32 %v316, %v341
        %v351 = vmul.f32 %v321, %v346
        %v352 = vld [vmem:[%s3] sm:$0xff]
        %v353 = vld [vmem:[%s3 + $0x8] sm:$0xff]
        %v354 = vld [vmem:[%s3 + $0x10] sm:$0xff]
        %v355 = vld [vmem:[%s3 + $0x18] sm:$0xff]
        %357 = vset.pattern.permute.xlu0 0
        %358 = vperm.xlu0 %357, %v352
        %v359 = vpop.permute.xlu0 %358
        %362 = vset.pattern.permute.xlu0 0
        %363 = vperm.xlu0 %362, %v353
        %v364 = vpop.permute.xlu0 %363
        %367 = vset.pattern.permute.xlu0 0
        %368 = vperm.xlu0 %367, %v354
        %v369 = vpop.permute.xlu0 %368
        %372 = vset.pattern.permute.xlu0 0
        %373 = vperm.xlu0 %372, %v355
        %v374 = vpop.permute.xlu0 %373
        %v376 = vadd.f32 %v348, %v359
        %v377 = vadd.f32 %v349, %v364
        %v378 = vadd.f32 %v350, %v369
        %v379 = vadd.f32 %v351, %v374
        %v380 = vmax.f32 %v376, 0.0
        %v381 = vmax.f32 %v377, 0.0
        %v382 = vmax.f32 %v378, 0.0
        %v383 = vmax.f32 %v379, 0.0
        %384 = vst [vmem:[%s208] sm:$0xff] %v380
        %385 = vst [vmem:[%s208 + $0x8] sm:$0xff] %v381
        %386 = vst [vmem:[%s208 + $0x10] sm:$0xff] %v382
        %387 = vst [vmem:[%s208 + $0x18] sm:$0xff] %v383
        %s388 = sand.u32 %s128, 1
        %s389 = sand.u32 %s128, 1
        %s390 = smul.addr %s389, 32
        %s391 = scalar_lea.vmem [#allocation2], %s390
        // Predicated region
        $region37: #{conv_transpose_block.3} parent=35 // pred_check
          %p392 = pneg %p138
        $region38: #{conv_transpose_block.3} parent=35 // pred_check_branch
          %394 = sbr.rel (%p392) target = $region40
        $region39: #{conv_transpose_block.3} parent=35 // pred_region
          %s395 = smul.addr %s19, 8
          %s396 = sadd.s32 %s20, %s395
          %s397 = smul.addr %s396, 8
          %s398 = scalar_lea.vmem %s4, %s397
          // Predicated region
          $region41: #{conv_transpose_block.3} parent=39 // pred_check
            _
          $region42: #{conv_transpose_block.3} parent=39 // pred_check_branch
            %400 = sbr.rel (0) target = $region44
          $region43: #{conv_transpose_block.3} parent=39 // pred_region
            // Predicated region
            $region45: #{conv_transpose_block.3} parent=43 // pred_check
              _
            $region46: #{conv_transpose_block.3} parent=43 // pred_check_branch
              %402 = sbr.rel (0) target = $region48
            $region47: #{conv_transpose_block.3} parent=43 // pred_region
              // Predicated region
              $region60: #{conv_transpose_block.3} parent=47 // pred_check
                _
              $region61: #{conv_transpose_block.3} parent=47 // pred_check_branch
                %424 = sbr.rel (0) target = $region63
              $region62: #{conv_transpose_block.3} parent=47 // pred_region
                loop: start=0, step=1, limit=1
                $region64: #{conv_transpose_block.3} parent=62 // loop_pre_header
                  _
                $region65: #{conv_transpose_block.3} parent=62 // loop_header
                  %s426 = sphi 0, %s430
                  %p427 = scmp.ge.s32.totalorder %s426, 1
                  %s431 = sphi %s391, %s391
                  %s432 = sphi %s398, %s398
                $region66: #{conv_transpose_block.3} parent=62 // loop_header_branch
                  %429 = sbr.rel (%p427) target = $region70
                $region67: #{conv_transpose_block.3} parent=62 // loop_body
                  %v433 = vld [vmem:[%s431] sm:$0xff]
                  %434 = vst [vmem:[%s432] sm:$0xff] %v433
                  %v435 = vld [vmem:[%s431 + $0x8] sm:$0xff]
                  %436 = vst [vmem:[%s432 + $0x10] sm:$0xff] %v435
                  %v437 = vld [vmem:[%s431 + $0x10] sm:$0xff]
                  %438 = vst [vmem:[%s432 + $0x20] sm:$0xff] %v437
                  %v439 = vld [vmem:[%s431 + $0x18] sm:$0xff]
                  %440 = vst [vmem:[%s432 + $0x30] sm:$0xff] %v439
                $region68: #{conv_transpose_block.3} parent=62 // loop_footer
                  %s430 = sadd.s32 1, %s426
                $region69: #{conv_transpose_block.3} parent=62 // loop_footer_branch
                  %425 = sbr.rel target = $region65
                $region70: #{conv_transpose_block.3} parent=62 // loop_exit
                  _
              $region63: #{conv_transpose_block.3} parent=47 // pred_fallthru
                _
              // Predicated region
              $region71: #{conv_transpose_block.3} parent=47 // pred_check
                _
              $region72: #{conv_transpose_block.3} parent=47 // pred_check_branch
                %442 = sbr.rel target = $region74
              $region73: #{conv_transpose_block.3} parent=47 // pred_region
                _
              $region74: #{conv_transpose_block.3} parent=47 // pred_fallthru
                _
            $region48: #{conv_transpose_block.3} parent=43 // pred_fallthru
              _
            // Predicated region
            $region49: #{conv_transpose_block.3} parent=43 // pred_check
              _
            $region50: #{conv_transpose_block.3} parent=43 // pred_check_branch
              %404 = sbr.rel target = $region52
            $region51: #{conv_transpose_block.3} parent=43 // pred_region
              %s406 = ssub.s32 256, 1
              loop: start=0, step=1, limit=1
              $region53: #{conv_transpose_block.3} parent=51 // loop_pre_header
                _
              $region54: #{conv_transpose_block.3} parent=51 // loop_header
                %s408 = sphi 0, %s412
                %p409 = scmp.ge.s32.totalorder %s408, 1
                %s413 = sphi %s391, %s391
                %s414 = sphi %s398, %s398
              $region55: #{conv_transpose_block.3} parent=51 // loop_header_branch
                %411 = sbr.rel (%p409) target = $region59
              $region56: #{conv_transpose_block.3} parent=51 // loop_body
                %v415 = vld [vmem:[%s413] sm:%s406]
                %416 = vst [vmem:[%s414] sm:%s406] %v415
                %v417 = vld [vmem:[%s413 + $0x8] sm:%s406]
                %418 = vst [vmem:[%s414 + $0x10] sm:%s406] %v417
                %v419 = vld [vmem:[%s413 + $0x10] sm:%s406]
                %420 = vst [vmem:[%s414 + $0x20] sm:%s406] %v419
                %v421 = vld [vmem:[%s413 + $0x18] sm:%s406]
                %422 = vst [vmem:[%s414 + $0x30] sm:%s406] %v421
              $region57: #{conv_transpose_block.3} parent=51 // loop_footer
                %s412 = sadd.s32 1, %s408
              $region58: #{conv_transpose_block.3} parent=51 // loop_footer_branch
                %407 = sbr.rel target = $region54
              $region59: #{conv_transpose_block.3} parent=51 // loop_exit
                _
            $region52: #{conv_transpose_block.3} parent=43 // pred_fallthru
              _
          $region44: #{conv_transpose_block.3} parent=39 // pred_fallthru
            _
          %443 = vnop
        $region40: #{conv_transpose_block.3} parent=35 // pred_fallthru
          _
      $region36: #{conv_transpose_block.3} parent=5 // pred_fallthru
        _
      %p444 = scmp.le.s32.totalorder 2, %s10
      // Predicated region
      $region75: #{conv_transpose_block.3} parent=5 // pred_check
        %p445 = pneg %p444
      $region76: #{conv_transpose_block.3} parent=5 // pred_check_branch
        %447 = sbr.rel (%p445) target = $region78
      $region77: #{conv_transpose_block.3} parent=5 // pred_region
        %s448 = ssub.s32 %s10, 2
        // Predicated region
        $region79: #{conv_transpose_block.3} parent=77 // pred_check
          %p449 = pneg %p144
        $region80: #{conv_transpose_block.3} parent=77 // pred_check_branch
          %451 = sbr.rel (%p449) target = $region82
        $region81: #{conv_transpose_block.3} parent=77 // pred_region
          %s452 = sand.u32 %s129, 1
          %s453 = sand.u32 %s129, 1
          %s454 = smul.addr %s453, 32
          %s455 = scalar_lea.vmem [#allocation2], %s454
        $region82: #{conv_transpose_block.3} parent=77 // pred_fallthru
          _
      $region78: #{conv_transpose_block.3} parent=5 // pred_fallthru
        _
    $region6: #{conv_transpose_block.3} parent=1 // loop_footer
      %s14 = sadd.s32 1, %s10
    $region7: #{conv_transpose_block.3} parent=1 // loop_footer_branch
      %9 = sbr.rel target = $region3
    $region8: #{conv_transpose_block.3} parent=1 // loop_exit
      _

</llo_original>
